<compile_context>
chip_gen: v6e
topology: v6e:2x2x1
jax: 0.10.0
libtpu: 0.0.40
codegen_flags: <defaults>
</compile_context>

<pallas_src>
import numpy as np
import jax
import jax.numpy as jnp
from jax.experimental import pallas as pl
from jax.experimental.pallas import tpu as pltpu


# --------------------------------------------------------------------------
# Shape / window helpers (aten AvgPool1d semantics)
# --------------------------------------------------------------------------
def _round_up(x, m):
    return ((x + m - 1) // m) * m


def _cdiv(a, b):
    return -(-a // b)


def _avg_pool1d_out_len(L, k, s, p, ceil_mode):
    num = L + 2 * p - k
    if ceil_mode:
        L_out = _cdiv(num, s) + 1
        # PyTorch: last window must start inside the input (or left padding).
        if (L_out - 1) * s >= L + p:
            L_out -= 1
    else:
        L_out = num // s + 1
    return L_out


def _window_params(j, k, s, p, L, count_include_pad):
    hstart = j * s - p
    hend = min(hstart + k, L + p)
    pool_size = hend - hstart            # includes padding region
    hs = max(hstart, 0)
    he = min(hend, L)
    div = pool_size if count_include_pad else max(he - hs, 1)
    return hs, he, max(div, 1)


def _tpu_generation_defaults():
    """(output lane alignment, per-core VMEM capacity in bytes)."""
    lane_align = 256                     # v6e / v7x MXUs are 256 lanes wide
    vmem_cap = 64 * 1024 * 1024          # conservative default (v7x physical)
    try:
        kind = jax.devices()[0].device_kind.lower()
        if "v5" in kind or "v4" in kind or "v3" in kind:
            lane_align = 128             # 128-wide MXU generations
    except Exception:
        pass
    try:
        info = pltpu.get_tpu_info()
        vmem_cap = int(getattr(info, "vmem_capacity_bytes", vmem_cap))
    except Exception:
        pass
    return lane_align, vmem_cap


def _build_banded_tables(L, L_out, k, s, p, count_include_pad,
                         tLb, nLb, nb, tn, n_col_tiles):
    """Per-(column-tile, band-block) 0/1 selection mask, per-column 1/divisor,
    and per-column-tile band start (in units of tLb input blocks)."""
    W = np.zeros((n_col_tiles * nb, tLb, tn), dtype=np.float32)
    recip = np.zeros((1, n_col_tiles * tn), dtype=np.float32)
    bb0 = np.zeros((n_col_tiles,), dtype=np.int32)
    for jt in range(n_col_tiles):
        start = (jt * tn) * s - p
        b0 = min(max(start // tLb, 0), nLb - nb)   # aligned, clamped band start
        bb0[jt] = b0
        base = b0 * tLb
        band = W[jt * nb:(jt + 1) * nb].reshape(nb * tLb, tn)  # contiguous view
        for c in range(tn):
            j = jt * tn + c
            if j >= L_out:
                continue                              # padded output columns
            hs, he, div = _window_params(j, k, s, p, L, count_include_pad)
            recip[0, j] = 1.0 / div
            if he <= hs:
                continue
            lo, hi = hs - base, he - base
            assert 0 <= lo and hi <= nb * tLb, (jt, c, lo, hi)
            band[lo:hi, c] = 1.0
    return W, recip, bb0


# --------------------------------------------------------------------------
# Kernel
# --------------------------------------------------------------------------
def _avgpool_kernel(bb0_ref, x_ref, w_ref, r_ref, o_ref, acc_ref):
    # bb0_ref is only used inside the index_maps (scalar prefetch).
    del bb0_ref
    b = pl.program_id(2)

    @pl.when(b == 0)
    def _init():
        acc_ref[...] = jnp.zeros_like(acc_ref)

    # Windowed-sum over one band block: (tm, tLb) @ (tLb, tn), f32 accumulate.
    acc_ref[...] += jnp.dot(x_ref[...], w_ref[0],
                            preferred_element_type=jnp.float32)

    @pl.when(b == pl.num_programs(2) - 1)
    def _finish():
        # Per-output-column 1/divisor applied as an f32 VPU multiply (exact
        # sums for bf16 inputs; divisor never quantized to the input dtype).
        o_ref[...] = (acc_ref[...] * r_ref[...]).astype(o_ref.dtype)


# --------------------------------------------------------------------------
# Wrapper
# --------------------------------------------------------------------------
def avg_pool1d_pallas(x, kernel_size, stride=None, padding=0,
                      ceil_mode=False, count_include_pad=True):
    """x: (N, C, L) float array. Returns (N, C, L_out), matching F.avg_pool1d."""
    N, C, L = x.shape
    k = int(kernel_size)
    s = k if stride is None else int(stride)
    p = int(padding)
    assert s > 0 and k > 0 and L + 2 * p >= k
    L_out = _avg_pool1d_out_len(L, k, s, p, ceil_mode)
    assert L_out > 0

    lane_align, vmem_cap = _tpu_generation_defaults()
    itemsize = jnp.dtype(x.dtype).itemsize

    # ---- choose the contraction ("band") block along L ---------------------
    # Only a k-wide window contributes to each output column, so each output-
    # column tile only needs the nb input blocks overlapping its windows.
    tLb, nLb, nb, band_tn = L, 1, 1, None          # dense fallback
    for cand in (512, 256, 128):
        if L % cand != 0 or L // cand < 2:
            continue
        n_blk = L // cand
        # Output-column tile sized so the band is only modestly wider than the
        # stride * tile span (keeps the x re-read factor near 1).
        tn_c = min(_round_up(L_out, lane_align),
                   max(lane_align,
                       _round_up(min(1024, max(1, (2 * cand) // s)), lane_align)))
        span = (tn_c - 1) * s + k
        nb_c = min(n_blk, _cdiv(span, cand) + 1)   # +1 for alignment slack
        if nb_c < n_blk:                           # banding actually saves work
            tLb, nLb, nb, band_tn = cand, n_blk, nb_c, tn_c
            break

    tn = band_tn if band_tn is not None else min(_round_up(L_out, lane_align), 512)
    L_out_pad = _round_up(L_out, tn)               # lane-dense, unmasked stores
    n_col_tiles = L_out_pad // tn

    W_np, recip_np, bb0_np = _build_banded_tables(
        L, L_out, k, s, p, count_include_pad, tLb, nLb, nb, tn, n_col_tiles)

    rows = N * C
    x2 = x.reshape(rows, L)                        # contiguous reshape, no cast
    W = jnp.asarray(W_np).astype(x.dtype)          # 0/1 mask, MXU operand
    recip = jnp.asarray(recip_np)                  # f32, applied on accumulator
    bb0 = jnp.asarray(bb0_np)                      # scalar-prefetched (SMEM)

    # ---- row tiling: fill a generation-aware VMEM budget --------------------
    row_align = max(8, 32 // max(itemsize, 1))     # 8 f32 / 16 bf16 / 32 int8
    budget = int(0.45 * vmem_cap)
    fixed = 2 * tLb * tn * itemsize + 2 * tn * 4                  # W + recip
    per_row = 2 * tLb * itemsize + 2 * tn * itemsize + tn * 4     # x, out, acc
    tm = max(row_align, ((budget - fixed) // max(per_row, 1)) // row_align * row_align)
    tm = min(tm, 1024)
    if tm >= rows:
        tm = rows                                  # full row extent: always legal
        # v7x has 2 TensorCores sharing the "parallel" rows axis; give each one
        # a block when the row count allows it.
        if rows >= 2 * row_align:
            tm = _round_up(_cdiv(rows, 2), row_align)
            if tm >= rows:
                tm = rows
    n_row_tiles = _cdiv(rows, tm)

    need = fixed + tm * per_row
    vmem_limit = int(min(0.9 * vmem_cap, max(need + (8 << 20), 32 << 20)))

    cost = pl.CostEstimate(
        flops=2 * n_row_tiles * tm * nb * tLb * n_col_tiles * tn,
        transcendentals=0,
        bytes_accessed=int(n_row_tiles * n_col_tiles * nb * tm * tLb * itemsize
                           + n_row_tiles * W.size * itemsize
                           + rows * L_out_pad * itemsize),
    )

    grid = (n_row_tiles, n_col_tiles, nb)
    out2 = pl.pallas_call(
        _avgpool_kernel,
        out_shape=jax.ShapeDtypeStruct((rows, L_out_pad), x.dtype),
        grid_spec=pltpu.PrefetchScalarGridSpec(
            num_scalar_prefetch=1,
            grid=grid,
            in_specs=[
                # x rows stream once per row tile; the L-block index is the
                # scalar-prefetched band start for this output-column tile.
                pl.BlockSpec((tm, tLb), lambda i, jt, b, bs: (i, bs[jt] + b)),
                # per-(column-tile, band-block) 0/1 selection mask
                pl.BlockSpec((1, tLb, tn), lambda i, jt, b, bs: (jt * nb + b, 0, 0)),
                # per-output-column reciprocal divisors (f32)
                pl.BlockSpec((1, tn), lambda i, jt, b, bs: (0, jt)),
            ],
            out_specs=pl.BlockSpec((tm, tn), lambda i, jt, b, bs: (i, jt)),
            scratch_shapes=[pltpu.VMEM((tm, tn), jnp.float32)],
        ),
        compiler_params=pltpu.CompilerParams(
            dimension_semantics=("parallel", "parallel", "arbitrary"),
            vmem_limit_bytes=vmem_limit,
        ),
        cost_estimate=cost,
    )(bb0, x2, W, recip)

    if L_out_pad != L_out:
        out2 = out2[:, :L_out]         # skipped when L_out is already aligned
    return out2.reshape(N, C, L_out)


# --------------------------------------------------------------------------
# Pure-numpy reference (PyTorch avg_pool1d semantics)
# --------------------------------------------------------------------------
def _ref_avg_pool1d(x, k, s, p, ceil_mode, count_include_pad):
    x = np.asarray(x, dtype=np.float32)
    N, C, L = x.shape
    L_out = _avg_pool1d_out_len(L, k, s, p, ceil_mode)
    out = np.zeros((N, C, L_out), dtype=np.float32)
    for j in range(L_out):
        hs, he, div = _window_params(j, k, s, p, L, count_include_pad)
        seg_sum = x[:, :, hs:he].sum(axis=-1) if he > hs else 0.0
        out[:, :, j] = seg_sum / div
    return out


if __name__ == "__main__":
    key = jax.random.PRNGKey(0)
    k1, k2 = jax.random.split(key)
    # Small deterministic inputs consistent with the module's NCL layout.
    x_small = jax.random.normal(k1, (2, 4, 16), dtype=jnp.float32)
    # Longer (still tiny in bytes) input to exercise the banded MXU path.
    x_long = jax.random.normal(k2, (2, 4, 2048), dtype=jnp.float32)

    cases = [
        (x_small, dict(kernel_size=4, stride=2, padding=1,
                       ceil_mode=False, count_include_pad=True)),
        (x_small, dict(kernel_size=3, stride=2, padding=1,
                       ceil_mode=True, count_include_pad=False)),
        (x_long, dict(kernel_size=4, stride=None, padding=0,
                      ceil_mode=False, count_include_pad=True)),
        (x_long, dict(kernel_size=5, stride=2, padding=2,
                      ceil_mode=True, count_include_pad=False)),
    ]
    for xin, cfg in cases:
        out = jax.block_until_ready(avg_pool1d_pallas(xin, **cfg))
        s_eff = cfg["kernel_size"] if cfg["stride"] is None else cfg["stride"]
        ref = _ref_avg_pool1d(np.asarray(xin), cfg["kernel_size"], s_eff,
                              cfg["padding"], cfg["ceil_mode"],
                              cfg["count_include_pad"])
        assert out.shape == ref.shape, (out.shape, ref.shape)
        np.testing.assert_allclose(np.asarray(out, dtype=np.float32), ref,
                                   rtol=1e-4, atol=1e-4)

    # bf16 path: 0/1 mask stays bf16 on the MXU, f32 accumulation, f32 divisor.
    x_bf = x_long.astype(jnp.bfloat16)
    out_bf = jax.block_until_ready(avg_pool1d_pallas(x_bf, 4))
    ref_bf = _ref_avg_pool1d(np.asarray(x_bf.astype(jnp.float32)),
                             4, 4, 0, False, True)
    np.testing.assert_allclose(np.asarray(out_bf.astype(jnp.float32)), ref_bf,
                               rtol=5e-2, atol=5e-2)

    print("KERNEL_OK")
</pallas_src>

<mosaic_0001>
module attributes {stable_mosaic.version = 11 : i64} {
  func.func @_avgpool_kernel(%arg0: i32, %arg1: i32, %arg2: i32, %arg3: memref<1xi32, #tpu.memory_space<smem>>, %arg4: memref<8x16xf32, #tpu.memory_space<vmem>>, %arg5: memref<1x16x256xf32, #tpu.memory_space<vmem>>, %arg6: memref<1x256xf32, #tpu.memory_space<vmem>>, %arg7: memref<8x256xf32, #tpu.memory_space<vmem>>, %arg8: memref<8x256xf32, #tpu.memory_space<vmem>>) attributes {dimension_semantics = [#tpu.dimension_semantics<parallel>, #tpu.dimension_semantics<parallel>, #tpu.dimension_semantics<arbitrary>], iteration_bounds = array<i64: 1, 1, 1>, scalar_prefetch = 1 : i64, scratch_operands = 1 : i64, tpu.core_type = #tpu.core_type<tc>, window_params = [{transform_indices = @transform_0, window_bounds = array<i64: 8, 16>}, {transform_indices = @transform_1, window_bounds = array<i64: 1, 16, 256>}, {transform_indices = @transform_2, window_bounds = array<i64: 1, 256>}, {transform_indices = @transform_3, window_bounds = array<i64: 8, 256>}]} {
    %c0_i32 = arith.constant 0 : i32
    %0 = arith.cmpi eq, %arg2, %c0_i32 : i32
    %1 = arith.extui %0 : i1 to i32
    %c0_i32_0 = arith.constant 0 : i32
    %2 = arith.cmpi ne, %1, %c0_i32_0 : i32
    scf.if %2 {
      %cst_11 = arith.constant 0.000000e+00 : f32
      %13 = vector.broadcast %cst_11 : f32 to vector<8x256xf32>
      %c0_12 = arith.constant 0 : index
      %c0_13 = arith.constant 0 : index
      %14 = vector.load %arg8[%c0_12, %c0_13] : memref<8x256xf32, #tpu.memory_space<vmem>>, vector<8x256xf32>
      tpu.vector_store %arg8[%c0_12, %c0_13], %13 {strides = array<i32>} : memref<8x256xf32, #tpu.memory_space<vmem>>, vector<8x256xf32>,
    } else {
    }
    %c0 = arith.constant 0 : index
    %c0_1 = arith.constant 0 : index
    %3 = vector.load %arg8[%c0, %c0_1] : memref<8x256xf32, #tpu.memory_space<vmem>>, vector<8x256xf32>
    %c0_2 = arith.constant 0 : index
    %c0_3 = arith.constant 0 : index
    %4 = vector.load %arg4[%c0_2, %c0_3] : memref<8x16xf32, #tpu.memory_space<vmem>>, vector<8x16xf32>
    %c0_4 = arith.constant 0 : index
    %c0_5 = arith.constant 0 : index
    %c0_6 = arith.constant 0 : index
    %5 = vector.load %arg5[%c0_4, %c0_5, %c0_6] : memref<1x16x256xf32, #tpu.memory_space<vmem>>, vector<1x16x256xf32>
    %6 = vector.shape_cast %5 : vector<1x16x256xf32> to vector<16x256xf32>
    %cst = arith.constant dense<0.000000e+00> : vector<8x256xf32>
    %7 = tpu.matmul %4, %6, %cst {dimension_numbers = #tpu.dot_dimension_numbers<[1], [0], [0], [1], [0, 0, 1, 1], [], []>} : vector<8x16xf32>, vector<16x256xf32>, vector<8x256xf32> -> vector<8x256xf32>
    %8 = arith.addf %3, %7 : vector<8x256xf32>
    %c0_7 = arith.constant 0 : index
    %c0_8 = arith.constant 0 : index
    %9 = vector.load %arg8[%c0_7, %c0_8] : memref<8x256xf32, #tpu.memory_space<vmem>>, vector<8x256xf32>
    tpu.vector_store %arg8[%c0_7, %c0_8], %8 {strides = array<i32>} : memref<8x256xf32, #tpu.memory_space<vmem>>, vector<8x256xf32>,
    %c0_i32_9 = arith.constant 0 : i32
    %10 = arith.cmpi eq, %arg2, %c0_i32_9 : i32
    %11 = arith.extui %10 : i1 to i32
    %c0_i32_10 = arith.constant 0 : i32
    %12 = arith.cmpi ne, %11, %c0_i32_10 : i32
    scf.if %12 {
      %c0_11 = arith.constant 0 : index
      %c0_12 = arith.constant 0 : index
      %13 = vector.load %arg8[%c0_11, %c0_12] : memref<8x256xf32, #tpu.memory_space<vmem>>, vector<8x256xf32>
      %c0_13 = arith.constant 0 : index
      %c0_14 = arith.constant 0 : index
      %14 = vector.load %arg6[%c0_13, %c0_14] : memref<1x256xf32, #tpu.memory_space<vmem>>, vector<1x256xf32>
      %15 = vector.broadcast %14 : vector<1x256xf32> to vector<8x256xf32>
      %16 = arith.mulf %13, %15 : vector<8x256xf32>
      %c0_15 = arith.constant 0 : index
      %c0_16 = arith.constant 0 : index
      %17 = vector.load %arg7[%c0_15, %c0_16] : memref<8x256xf32, #tpu.memory_space<vmem>>, vector<8x256xf32>
      tpu.vector_store %arg7[%c0_15, %c0_16], %16 {strides = array<i32>} : memref<8x256xf32, #tpu.memory_space<vmem>>, vector<8x256xf32>,
    } else {
    }
    return
  }
  func.func @transform_0(%arg0: i32, %arg1: i32, %arg2: i32, %arg3: memref<1xi32, #tpu.memory_space<smem>>) -> (i32, i32) {
    %0 = arith.index_cast %arg1 : i32 to index
    %1 = memref.load %arg3[%0] : memref<1xi32, #tpu.memory_space<smem>>
    %2 = arith.addi %1, %arg2 : i32
    %c0_i32 = arith.constant 0 : i32
    return %arg0, %2 : i32, i32
  }
  func.func @transform_1(%arg0: i32, %arg1: i32, %arg2: i32, %arg3: memref<1xi32, #tpu.memory_space<smem>>) -> (i32, i32, i32) {
    %c1_i32 = arith.constant 1 : i32
    %0 = arith.muli %arg1, %c1_i32 : i32
    %1 = arith.addi %0, %arg2 : i32
    %c0_i32 = arith.constant 0 : i32
    %c0_i32_0 = arith.constant 0 : i32
    %c0_i32_1 = arith.constant 0 : i32
    return %1, %c0_i32, %c0_i32_0 : i32, i32, i32
  }
  func.func @transform_2(%arg0: i32, %arg1: i32, %arg2: i32, %arg3: memref<1xi32, #tpu.memory_space<smem>>) -> (i32, i32) {
    %c0_i32 = arith.constant 0 : i32
    %c0_i32_0 = arith.constant 0 : i32
    return %c0_i32, %arg1 : i32, i32
  }
  func.func @transform_3(%arg0: i32, %arg1: i32, %arg2: i32, %arg3: memref<1xi32, #tpu.memory_space<smem>>) -> (i32, i32) {
    %c0_i32 = arith.constant 0 : i32
    return %arg0, %arg1 : i32, i32
  }
}

</mosaic_0001>

<llo_original>
// kernel: tpu_custom_call.1
$region0: #{tpu_custom_call.1}
  #allocation0 [shape = 'u32[]', space=smem, size = 0x4, offset = 0x4, fixed_abs, tag = 'smem constant byte address 0x4 - core index']
  #allocation1 [shape = 'u32[144,128]{1,0:T(1,128)}', space=vmem, size = 0x12000, scoped, tag = 'internal scratch']
  #allocation2 [shape = 'f32[8,256]{1,0:T(8,128)}', space=vmem, size = 0x2000, scoped, tag = 'scratch operand']
  #allocation3 [shape = 's32[1]{0}', space=sflag, size = 0x4, scoped, tag = 'scoped memory for tpu_custom_call.1']
  #allocation4 [shape = 's32[1]{0:T(128)S(6)}', space=smem, size = 0x200, scoped, tag = 'prefetched SMEM operand 0']
  %s0 = inlined_call_operand.<no memory space> [shape: s32[1], index: 0, kind: input, shape index: {}]
  %s1 = inlined_call_operand.hbm [shape: f32[8,16], index: 1, kind: input, shape index: {}]
  %s2 = inlined_call_operand.hbm [shape: f32[1,16,256], index: 2, kind: input, shape index: {}]
  %s3 = inlined_call_operand.vmem [shape: f32[1,256], index: 3, kind: input, shape index: {}]
  %s4 = inlined_call_operand.hbm [shape: f32[8,256], index: 4, kind: output, shape index: {}]
  %s5 = sld [smem:[#allocation0]]
  $region38: #{tpu_custom_call.1} parent=0
    _
  %s7 = ssub.s32 1, %s5
  %s8 = scalar_select 0, %s7, %s5
  %9 = sst [smem:[#allocation4]] %s0
  $region1: #{tpu_custom_call.1} parent=0
    #allocation5 [shape = 'u8[4096]{0}', space=vmem, size = 0x1000, scoped, tag = 'input window, operand 1, single buffered']
    #allocation6 [shape = 's32[1]{0}', space=sflag, size = 0x4, scoped, tag = 'scoped memory for tpu_custom_call.1']
    #allocation7 [shape = 's32[1]{0}', space=sflag, size = 0x4, scoped, tag = 'scoped memory for tpu_custom_call.1']
    #allocation8 [shape = 'u8[16384]{0}', space=vmem, size = 0x4000, scoped, tag = 'input window, operand 2, single buffered']
    #allocation9 [shape = 's32[1]{0}', space=sflag, size = 0x4, scoped, tag = 'scoped memory for tpu_custom_call.1']
    #allocation10 [shape = 'u8[8192]{0}', space=vmem, size = 0x2000, scoped, tag = 'output window, operand 0, single buffered']
    %10 = vsyncpa [#allocation6], 0
    %11 = vsyncpa [#allocation9], 0
    %12 = vsyncpa [#allocation7], 0
    // Predicated region
    $region2: #{tpu_custom_call.1} parent=1 // pred_check
      _
    $region3: #{tpu_custom_call.1} parent=1 // pred_check_branch
      %14 = sbr.rel (0) target = $region5
    $region4: #{tpu_custom_call.1} parent=1 // pred_region
      %s15 = sld [smem:[#allocation4]]
      %s16 = sadd.s32 %s15, 0
      %s18 = ssub.s32 128, 128
      %19 = vsyncadd [#allocation6], %s18
      %s20 = smul.addr %s16, 128
      %s21 = scalar_lea.hbm %s1, %s20
      %s23 = sshll.u32 [#allocation5], 4
      %s24 = int_to_ptr.vmem [resolvable:$true] %s23
      %26 = dma.hbm_to_vmem [thread:$0]  %s21, 128, %s24, [#allocation6]
    $region5: #{tpu_custom_call.1} parent=1 // pred_fallthru
      _
    // Predicated region
    $region6: #{tpu_custom_call.1} parent=1 // pred_check
      _
    $region7: #{tpu_custom_call.1} parent=1 // pred_check_branch
      %28 = sbr.rel (0) target = $region9
    $region8: #{tpu_custom_call.1} parent=1 // pred_region
      %s29 = sadd.s32 0, 0
      %s31 = ssub.s32 512, 512
      %32 = vsyncadd [#allocation9], %s31
      %s33 = smul.addr %s29, 4
      %s34 = smul.addr %s33, 128
      %s35 = scalar_lea.hbm %s2, %s34
      %s36 = sshll.u32 [#allocation8], 4
      %s37 = int_to_ptr.vmem [resolvable:$true] %s36
      %42 = dma.hbm_to_vmem [thread:$0]  %s35, 512, %s37, [#allocation9], 256, 256, 16
    $region9: #{tpu_custom_call.1} parent=1 // pred_fallthru
      _
    // Predicated region
    $region10: #{tpu_custom_call.1} parent=1 // pred_check
      _
    $region11: #{tpu_custom_call.1} parent=1 // pred_check_branch
      %44 = sbr.rel (0) target = $region13
    $region12: #{tpu_custom_call.1} parent=1 // pred_region
      _
    $region13: #{tpu_custom_call.1} parent=1 // pred_fallthru
      _
    // Predicated region
    $region14: #{tpu_custom_call.1} parent=1 // pred_check
      _
    $region15: #{tpu_custom_call.1} parent=1 // pred_check_branch
      %46 = sbr.rel (0) target = $region17
    $region16: #{tpu_custom_call.1} parent=1 // pred_region
      %47 = dma.done [#allocation6], 128
    $region17: #{tpu_custom_call.1} parent=1 // pred_fallthru
      _
    // Predicated region
    $region18: #{tpu_custom_call.1} parent=1 // pred_check
      _
    $region19: #{tpu_custom_call.1} parent=1 // pred_check_branch
      %49 = sbr.rel (0) target = $region21
    $region20: #{tpu_custom_call.1} parent=1 // pred_region
      %50 = dma.done [#allocation9], 512
    $region21: #{tpu_custom_call.1} parent=1 // pred_fallthru
      _
    %s51 = sld [smem:[#allocation4]]
    %s52 = sadd.s32 %s51, 0
    %s53 = sadd.s32 0, 0
    %p54 = scmp.eq.s32.totalorder 0, 0
    // Predicated region
    $region22: #{tpu_custom_call.1} parent=1 // pred_check
      %p55 = pneg %p54
    $region23: #{tpu_custom_call.1} parent=1 // pred_check_branch
      %57 = sbr.rel (%p55) target = $region25
    $region24: #{tpu_custom_call.1} parent=1 // pred_region
      %58 = vst [vmem:[#allocation2] sm:$0xff] 0.0
      %59 = vst [vmem:[#allocation2 + $0x8] sm:$0xff] 0.0
    $region25: #{tpu_custom_call.1} parent=1 // pred_fallthru
      _
    %v60 = vld [vmem:[#allocation2] sm:$0xff]
    %v61 = vld [vmem:[#allocation2 + $0x8] sm:$0xff]
    %v62 = vld [vmem:[#allocation5] sm:$0xff]
    %v63 = vld [vmem:[#allocation8] sm:$0xff]
    %v64 = vld [vmem:[#allocation8 + $0x8] sm:$0xff]
    %v65 = vld [vmem:[#allocation8 + $0x10] sm:$0xff]
    %v66 = vld [vmem:[#allocation8 + $0x18] sm:$0xff]
    %vm67 = vcmask 130048
    %v69 = vsel %vm67, %v62, 0
    %71 = vmatprep.subr.mxu0 0.0
    %72 = vmatpush1.msra.mxu0 0.0
    %73 = vmatprep.subr.mxu0 0.0
    %74 = vmatpush1.msra.mxu0 0.0
    %75 = vmatprep.subr.mxu0 0.0
    %76 = vmatpush1.msra.mxu0 0.0
    %77 = vmatprep.subr.mxu0 0.0
    %78 = vmatpush1.msra.mxu0 0.0
    %79 = vmatprep.subr.mxu0 0.0
    %80 = vmatpush1.msra.mxu0 0.0
    %81 = vmatprep.subr.mxu0 0.0
    %82 = vmatpush1.msra.mxu0 0.0
    %83 = vmatprep.subr.mxu0 0.0
    %84 = vmatpush1.msra.mxu0 0.0
    %85 = vmatprep.subr.mxu0 0.0
    %86 = vmatpush1.msra.mxu0 0.0
    %87 = vmatprep.subr.mxu0 0.0
    %88 = vmatpush1.msra.mxu0 0.0
    %89 = vmatprep.subr.mxu0 0.0
    %90 = vmatpush1.msra.mxu0 0.0
    %91 = vmatprep.subr.mxu0 0.0
    %92 = vmatpush1.msra.mxu0 0.0
    %93 = vmatprep.subr.mxu0 0.0
    %94 = vmatpush1.msra.mxu0 0.0
    %95 = vmatprep.subr.mxu0 0.0
    %96 = vmatpush1.msra.mxu0 0.0
    %97 = vmatprep.subr.mxu0 0.0
    %98 = vmatpush1.msra.mxu0 0.0
    %99 = vmatprep.subr.mxu0 %v66
    %100 = vmatpush1.msra.mxu0 %v65
    %101 = vmatprep.subr.mxu0 %v64
    %102 = vmatpush1.msra.mxu0 %v63
    %103 = vmatprep.subr.mxu0 0.0
    %104 = vmatpush2.msra.mxu0 0.0
    %105 = vmatprep.subr.mxu0 0.0
    %106 = vmatpush2.msra.mxu0 0.0
    %107 = vmatprep.subr.mxu0 0.0
    %108 = vmatpush2.msra.mxu0 0.0
    %109 = vmatprep.subr.mxu0 0.0
    %110 = vmatpush2.msra.mxu0 0.0
    %111 = vmatprep.subr.mxu0 0.0
    %112 = vmatpush2.msra.mxu0 0.0
    %113 = vmatprep.subr.mxu0 0.0
    %114 = vmatpush2.msra.mxu0 0.0
    %115 = vmatprep.subr.mxu0 0.0
    %116 = vmatpush2.msra.mxu0 0.0
    %117 = vmatprep.subr.mxu0 0.0
    %118 = vmatpush2.msra.mxu0 0.0
    %119 = vmatprep.subr.mxu0 0.0
    %120 = vmatpush2.msra.mxu0 0.0
    %121 = vmatprep.subr.mxu0 0.0
    %122 = vmatpush2.msra.mxu0 0.0
    %123 = vmatprep.subr.mxu0 0.0
    %124 = vmatpush2.msra.mxu0 0.0
    %125 = vmatprep.subr.mxu0 0.0
    %126 = vmatpush2.msra.mxu0 0.0
    %127 = vmatprep.subr.mxu0 0.0
    %128 = vmatpush2.msra.mxu0 0.0
    %129 = vmatprep.subr.mxu0 0.0
    %130 = vmatpush2.msra.mxu0 0.0
    %131 = vmatprep.subr.mxu0 0.0
    %132 = vmatpush2.msra.mxu0 0.0
    %133 = vmatprep.subr.mxu0 0.0
    %134 = vmatpush2.msra.mxu0 0.0
    %135 = vmatprep.mubr.f32.mxu0 0.0
    %136 = vmatmul.mubr.f32.gmra.mxu0 %v69
    %v137 = vpop.f32.mrf.mxu0
    %v138 = vadd.f32 0.0, %v137
    %v139 = vpop.f32.mrf.mxu0
    %v140 = vadd.f32 0.0, %v139
    %141 = vdwg.mxu0
    %v142 = vadd.f32 %v60, %v138
    %v143 = vadd.f32 %v61, %v140
    %144 = vst [vmem:[#allocation2] sm:$0xff] %v142
    %145 = vst [vmem:[#allocation2 + $0x8] sm:$0xff] %v143
    // Predicated region
    $region26: #{tpu_custom_call.1} parent=1 // pred_check
      %p146 = pneg %p54
    $region27: #{tpu_custom_call.1} parent=1 // pred_check_branch
      %148 = sbr.rel (%p146) target = $region29
    $region28: #{tpu_custom_call.1} parent=1 // pred_region
      %v149 = vld [vmem:[#allocation2] sm:$0xff]
      %v150 = vld [vmem:[#allocation2 + $0x8] sm:$0xff]
      %v151 = vld [vmem:[%s3] sm:$0x3]
      %v153 = vlaneseq
      %v154 = vshrl.u32 %v153, 7
      %v155 = vsub.s32 0, %v154
      %v156 = vrot.slane %v151, %v155
      %v157 = vlaneseq
      %v158 = vshrl.u32 %v157, 7
      %v159 = vsub.s32 1, %v158
      %v160 = vrot.slane %v151, %v159
      %v163 = vmul.f32 %v149, %v156
      %v164 = vmul.f32 %v150, %v160
      %165 = vst [vmem:[#allocation10] sm:$0xff] %v163
      %166 = vst [vmem:[#allocation10 + $0x8] sm:$0xff] %v164
    $region29: #{tpu_custom_call.1} parent=1 // pred_fallthru
      _
    // Predicated region
    $region30: #{tpu_custom_call.1} parent=1 // pred_check
      _
    $region31: #{tpu_custom_call.1} parent=1 // pred_check_branch
      %168 = sbr.rel (0) target = $region33
    $region32: #{tpu_custom_call.1} parent=1 // pred_region
      %s170 = ssub.s32 256, 256
      %171 = vsyncadd [#allocation7], %s170
      %s173 = sshll.u32 [#allocation10], 4
      %s174 = int_to_ptr.vmem [resolvable:$true] %s173
      %176 = dma.vmem_to_hbm [thread:$0]  %s174, 256, %s4, [#allocation7]
    $region33: #{tpu_custom_call.1} parent=1 // pred_fallthru
      _
    // Predicated region
    $region34: #{tpu_custom_call.1} parent=1 // pred_check
      _
    $region35: #{tpu_custom_call.1} parent=1 // pred_check_branch
      %178 = sbr.rel (0) target = $region37
    $region36: #{tpu_custom_call.1} parent=1 // pred_region
      %179 = dma.done [#allocation7], 256
    $region37: #{tpu_custom_call.1} parent=1 // pred_fallthru
      _
    %180 = vsyncpa [#allocation6], 1
    %181 = vsyncpa [#allocation9], 1
    %182 = vsyncpa [#allocation7], 1

</llo_original>
